<compile_context>
chip_gen: v5e
topology: v5e:2x2
jax: 0.10.0
libtpu: 0.0.40
codegen_flags: <defaults>
</compile_context>

<pallas_src>
import math

import jax
import jax.numpy as jnp
import numpy as np
from jax.experimental import pallas as pl
from jax.experimental.pallas import tpu as pltpu

# --- module hyper-parameters (m=0.5, s=64.0 as in the PyTorch __init__) ------
M_MARGIN = 0.5
SCALE = 64.0
COS_M = math.cos(M_MARGIN)
SIN_M = math.sin(M_MARGIN)
THRESHOLD = math.cos(math.pi - M_MARGIN)
MM = math.sin(math.pi - M_MARGIN) * M_MARGIN


# --- the one hot-path kernel: streaming elementwise over a (TB, TC) block ----
def _curricular_kernel(cos_ref, lab_ref, ctm_ref, ftl_ref, t_ref, out_ref):
    tile_c = cos_ref.shape[1]                                     # static int
    # Compute in f32 regardless of storage dtype (bf16 storage still halves
    # HBM traffic; math stays f32 so v5e pays no bf16-VPU penalty).
    ct = jnp.clip(cos_ref[...].astype(jnp.float32), -1.0, 1.0)    # [TB, TC]
    lab = lab_ref[...]                                            # [TB, 1] int32
    ctm = ctm_ref[...]                                            # [TB, 1] f32
    ftl = ftl_ref[...]                                            # [TB, 1] f32
    t = t_ref[0]                                                  # f32 scalar (SMEM)

    # Hard-example reweighting: cos_theta[mask] = hard * (t + hard)
    out = jnp.where(ct > ctm, ct * (t + ct), ct)

    # Scatter the final target logit into the label column of valid rows;
    # column indices are offset by the class-tile position on the grid.
    cols = (jax.lax.broadcasted_iota(jnp.int32, ct.shape, 1)
            + pl.program_id(1) * tile_c)
    is_target = (cols == lab) & (lab != -1)
    out = jnp.where(is_target, ftl, out)

    out_ref[...] = (out * SCALE).astype(out_ref.dtype)


def _choose_tile(dim, preferred, align):
    """Largest multiple of `align` that divides `dim` and is <= `preferred`;
    falls back to the full dim (always a legal block size)."""
    if dim <= preferred:
        return dim
    t = (preferred // align) * align
    while t >= align:
        if dim % t == 0:
            return t
        t -= align
    return dim


# --- wrapper ------------------------------------------------------------------
def curricular_face(cos_theta, labels, t, *, tile_b=256, tile_c=2048):
    """CurricularFace forward.  Returns (output [B, C], updated t buffer [1])."""
    B, C = cos_theta.shape
    labels = labels.astype(jnp.int32)
    valid = labels != -1

    # ---- per-row prep in plain JAX: touches only O(B) elements of HBM -------
    gathered = jnp.take_along_axis(
        cos_theta, jnp.clip(labels, 0, C - 1)[:, None], axis=1)[:, 0]
    target_logit = jnp.where(valid, jnp.clip(gathered, -1.0, 1.0), 0.0)
    target_logit = target_logit.astype(jnp.float32)

    # TODO(synk): dist.all_reduce(total_target_logit) is an identity for
    # world_size=1; a multi-device port would psum `target_logit` here.

    # running-mean buffer update (float32 end-to-end):
    # self.t = mean(target_logit)*0.01 + 0.99*self.t
    t = t.astype(jnp.float32)
    t_new = jnp.mean(target_logit) * 0.01 + (1.0 - 0.01) * t          # (1,)

    sin_theta = jnp.sqrt(jnp.maximum(1.0 - target_logit * target_logit, 0.0))
    cos_theta_m = target_logit * COS_M - sin_theta * SIN_M            # [B]
    final_tgt = jnp.where(target_logit > THRESHOLD,
                          cos_theta_m, target_logit - MM)             # [B]

    labels2d = labels.reshape(B, 1)
    ctm2d = cos_theta_m.reshape(B, 1).astype(jnp.float32)
    ftl2d = final_tgt.reshape(B, 1).astype(jnp.float32)
    t_smem = t_new.reshape(1).astype(jnp.float32)

    # ---- single streaming pass over [B, C] -----------------------------------
    tb = _choose_tile(B, tile_b, 8)       # sublane-aligned batch tile
    tc = _choose_tile(C, tile_c, 128)     # lane-dense class tile
    assert B % tb == 0 and C % tc == 0
    grid = (B // tb, C // tc)

    out = pl.pallas_call(
        _curricular_kernel,
        out_shape=jax.ShapeDtypeStruct((B, C), cos_theta.dtype),
        grid=grid,
        in_specs=[
            pl.BlockSpec((tb, tc), lambda i, j: (i, j)),
            # per-row operands: block index constant along the inner class
            # axis, so Pallas fetches them once per batch tile.
            pl.BlockSpec((tb, 1), lambda i, j: (i, 0)),
            pl.BlockSpec((tb, 1), lambda i, j: (i, 0)),
            pl.BlockSpec((tb, 1), lambda i, j: (i, 0)),
            # updated t scalar lives in SMEM (no per-step vector DMA).
            pl.BlockSpec(memory_space=pltpu.MemorySpace.SMEM),
        ],
        out_specs=pl.BlockSpec((tb, tc), lambda i, j: (i, j)),
        input_output_aliases={0: 0},   # cos_theta is dead after this call
        compiler_params=pltpu.CompilerParams(
            dimension_semantics=("parallel", "parallel"),
            vmem_limit_bytes=40 * 1024 * 1024,
        ),
    )(cos_theta, labels2d, ctm2d, ftl2d, t_smem)

    return out, t_new


# --- pure-JAX reference (mirrors the PyTorch forward) --------------------------
def _reference(cos_theta, labels, t):
    ct = jnp.clip(cos_theta, -1.0, 1.0)
    valid = labels != -1
    tgt = jnp.take_along_axis(ct, jnp.clip(labels, 0, None)[:, None], axis=1)[:, 0]
    tgt = jnp.where(valid, tgt, 0.0)
    t_new = jnp.mean(tgt) * 0.01 + (1.0 - 0.01) * t
    sin_theta = jnp.sqrt(jnp.maximum(1.0 - tgt * tgt, 0.0))
    ctm = tgt * COS_M - sin_theta * SIN_M
    mask = ct > ctm[:, None]
    out = jnp.where(mask, ct * (t_new + ct), ct)
    final = jnp.where(tgt > THRESHOLD, ctm, tgt - MM)
    cols = jnp.arange(ct.shape[1])[None, :]
    is_tgt = (cols == labels[:, None]) & valid[:, None]
    out = jnp.where(is_tgt, final[:, None], out)
    return out * SCALE, t_new


if __name__ == "__main__":
    key = jax.random.PRNGKey(0)
    B, C = 16, 512  # small batch of cosine logits over C classes

    k1, k2 = jax.random.split(key)
    # slightly outside [-1, 1] to exercise the clamp
    cos_theta = jax.random.uniform(k1, (B, C), jnp.float32, minval=-1.1, maxval=1.1)
    labels = jax.random.randint(k2, (B,), 0, C, dtype=jnp.int32)
    labels = labels.at[3].set(-1)  # one invalid row (label == -1)
    t0 = jnp.zeros((1,), jnp.float32)  # registered buffer `t`

    # compute the reference BEFORE the kernel call: cos_theta's HBM buffer is
    # donated to the kernel output via input_output_aliases.
    ref_out, ref_t = _reference(cos_theta, labels, t0)
    ref_out = jax.block_until_ready(ref_out)

    # small explicit tiles here just to exercise the 2-D (batch, class) grid
    # and the class-tile column offset at toy shapes; defaults are 256x2048.
    out, t_new = curricular_face(cos_theta, labels, t0, tile_b=8, tile_c=128)
    out = jax.block_until_ready(out)
    t_new = jax.block_until_ready(t_new)

    np.testing.assert_allclose(np.asarray(out), np.asarray(ref_out), rtol=1e-5, atol=1e-5)
    np.testing.assert_allclose(np.asarray(t_new), np.asarray(ref_t), rtol=1e-6, atol=1e-6)

    print("KERNEL_OK")
</pallas_src>

<mosaic_0001>
module attributes {stable_mosaic.version = 11 : i64} {
  func.func @_curricular_kernel(%arg0: i32, %arg1: i32, %arg2: memref<8x128xf32, #tpu.memory_space<vmem>>, %arg3: memref<8x1xi32, #tpu.memory_space<vmem>>, %arg4: memref<8x1xf32, #tpu.memory_space<vmem>>, %arg5: memref<8x1xf32, #tpu.memory_space<vmem>>, %arg6: memref<1xf32, #tpu.memory_space<smem>>, %arg7: memref<8x128xf32, #tpu.memory_space<vmem>>) attributes {dimension_semantics = [#tpu.dimension_semantics<parallel>, #tpu.dimension_semantics<parallel>], iteration_bounds = array<i64: 2, 4>, scalar_prefetch = 0 : i64, scratch_operands = 0 : i64, tpu.core_type = #tpu.core_type<tc>, window_params = [{transform_indices = @transform_0, window_bounds = array<i64: 8, 128>}, {transform_indices = @transform_1, window_bounds = array<i64: 8, 1>}, {transform_indices = @transform_2, window_bounds = array<i64: 8, 1>}, {transform_indices = @transform_3, window_bounds = array<i64: 8, 1>}, {transform_indices = @transform_4, window_bounds = array<i64: 1>}, {transform_indices = @transform_5, window_bounds = array<i64: 8, 128>}]} {
    %c0 = arith.constant 0 : index
    %c0_0 = arith.constant 0 : index
    %0 = vector.load %arg2[%c0, %c0_0] : memref<8x128xf32, #tpu.memory_space<vmem>>, vector<8x128xf32>
    %cst = arith.constant -1.000000e+00 : f32
    %cst_1 = arith.constant 1.000000e+00 : f32
    %1 = vector.broadcast %cst : f32 to vector<8x128xf32>
    %2 = arith.maximumf %1, %0 : vector<8x128xf32>
    %3 = vector.broadcast %cst_1 : f32 to vector<8x128xf32>
    %4 = arith.minimumf %3, %2 : vector<8x128xf32>
    %c0_2 = arith.constant 0 : index
    %c0_3 = arith.constant 0 : index
    %5 = vector.load %arg3[%c0_2, %c0_3] : memref<8x1xi32, #tpu.memory_space<vmem>>, vector<8x1xi32>
    %c0_4 = arith.constant 0 : index
    %c0_5 = arith.constant 0 : index
    %6 = vector.load %arg4[%c0_4, %c0_5] : memref<8x1xf32, #tpu.memory_space<vmem>>, vector<8x1xf32>
    %c0_6 = arith.constant 0 : index
    %c0_7 = arith.constant 0 : index
    %7 = vector.load %arg5[%c0_6, %c0_7] : memref<8x1xf32, #tpu.memory_space<vmem>>, vector<8x1xf32>
    %c0_8 = arith.constant 0 : index
    %8 = memref.load %arg6[%c0_8] : memref<1xf32, #tpu.memory_space<smem>>
    %9 = vector.broadcast %6 : vector<8x1xf32> to vector<8x128xf32>
    %10 = arith.cmpf ogt, %4, %9 : vector<8x128xf32>
    %11 = vector.broadcast %8 : f32 to vector<8x128xf32>
    %12 = arith.addf %11, %4 : vector<8x128xf32>
    %13 = arith.mulf %4, %12 : vector<8x128xf32>
    %14 = arith.select %10, %13, %4 : vector<8x128xi1>, vector<8x128xf32>
    %15 = tpu.iota {dimensions = array<i32: 1>} : vector<8x128xi32>
    %c128_i32 = arith.constant 128 : i32
    %16 = arith.muli %arg1, %c128_i32 : i32
    %17 = vector.broadcast %16 : i32 to vector<8x128xi32>
    %18 = arith.addi %15, %17 : vector<8x128xi32>
    %19 = vector.broadcast %5 : vector<8x1xi32> to vector<8x128xi32>
    %20 = arith.cmpi eq, %18, %19 : vector<8x128xi32>
    %c-1_i32 = arith.constant -1 : i32
    %21 = vector.broadcast %c-1_i32 : i32 to vector<8x1xi32>
    %22 = arith.cmpi ne, %5, %21 : vector<8x1xi32>
    %23 = vector.broadcast %22 : vector<8x1xi1> to vector<8x128xi1>
    %24 = arith.andi %20, %23 : vector<8x128xi1>
    %25 = vector.shape_cast %7 : vector<8x1xf32> to vector<8x1xf32>
    %26 = vector.broadcast %25 : vector<8x1xf32> to vector<8x128xf32>
    %27 = arith.select %24, %26, %14 : vector<8x128xi1>, vector<8x128xf32>
    %cst_9 = arith.constant 6.400000e+01 : f32
    %28 = vector.broadcast %cst_9 : f32 to vector<8x128xf32>
    %29 = arith.mulf %27, %28 : vector<8x128xf32>
    %c0_10 = arith.constant 0 : index
    %c0_11 = arith.constant 0 : index
    %30 = vector.load %arg7[%c0_10, %c0_11] : memref<8x128xf32, #tpu.memory_space<vmem>>, vector<8x128xf32>
    tpu.vector_store %arg7[%c0_10, %c0_11], %29 {strides = array<i32>} : memref<8x128xf32, #tpu.memory_space<vmem>>, vector<8x128xf32>,
    return
  }
  func.func @transform_0(%arg0: i32, %arg1: i32) -> (i32, i32) {
    %c0_i32 = arith.constant 0 : i32
    return %arg0, %arg1 : i32, i32
  }
  func.func @transform_1(%arg0: i32, %arg1: i32) -> (i32, i32) {
    %c0_i32 = arith.constant 0 : i32
    %c0_i32_0 = arith.constant 0 : i32
    return %arg0, %c0_i32 : i32, i32
  }
  func.func @transform_2(%arg0: i32, %arg1: i32) -> (i32, i32) {
    %c0_i32 = arith.constant 0 : i32
    %c0_i32_0 = arith.constant 0 : i32
    return %arg0, %c0_i32 : i32, i32
  }
  func.func @transform_3(%arg0: i32, %arg1: i32) -> (i32, i32) {
    %c0_i32 = arith.constant 0 : i32
    %c0_i32_0 = arith.constant 0 : i32
    return %arg0, %c0_i32 : i32, i32
  }
  func.func @transform_4(%arg0: i32, %arg1: i32) -> i32 {
    %c0_i32 = arith.constant 0 : i32
    %c0_i32_0 = arith.constant 0 : i32
    return %c0_i32 : i32
  }
  func.func @transform_5(%arg0: i32, %arg1: i32) -> (i32, i32) {
    %c0_i32 = arith.constant 0 : i32
    return %arg0, %arg1 : i32, i32
  }
}

</mosaic_0001>

<llo_original>
// kernel: tpu_custom_call.1
$region0: #{tpu_custom_call.1}
  #allocation0 [shape = 'u32[]', space=smem, size = 0x4, offset = 0x4, fixed_abs, tag = 'smem constant byte address 0x4 - core index']
  #allocation1 [shape = 'u32[72,128]{1,0:T(1,128)}', space=vmem, size = 0x9000, scoped, tag = 'internal scratch']
  #allocation2 [shape = 'f32[1]{0:T(128)S(6)}', space=smem, size = 0x200, scoped, tag = 'scoped memory for tpu_custom_call.1']
  %s0 = inlined_call_operand.hbm [shape: f32[16,512], index: 0, kind: input, shape index: {}, may-alias: {0,5}]
  %s1 = inlined_call_operand.vmem [shape: s32[16,1], index: 1, kind: input, shape index: {}]
  %s2 = inlined_call_operand.vmem [shape: f32[16,1], index: 2, kind: input, shape index: {}]
  %s3 = inlined_call_operand.vmem [shape: f32[16,1], index: 3, kind: input, shape index: {}]
  %s4 = inlined_call_operand.<no memory space> [shape: f32[1], index: 4, kind: input, shape index: {}]
  %s5 = inlined_call_operand.hbm [shape: f32[16,512], index: 5, kind: output, shape index: {}, may-alias: {0,5}]
  %s6 = sld [smem:[#allocation0]]
  $region57: #{tpu_custom_call.1} parent=0
    _
  %s8 = ssub.s32 1, %s6
  %s9 = scalar_select 0, %s8, %s6
  %10 = sst [smem:[#allocation2]] %s4
  $region1: #{tpu_custom_call.1} parent=0
    #allocation3 [shape = 'u8[8192]{0}', space=vmem, size = 0x2000, scoped, tag = 'input window, operand 0']
    #allocation4 [shape = 's32[2]{0}', space=sflag, size = 0x8, scoped, tag = 'scoped memory for tpu_custom_call.1']
    #allocation5 [shape = 's32[2]{0}', space=sflag, size = 0x8, scoped, tag = 'scoped memory for tpu_custom_call.1']
    #allocation6 [shape = 'u8[8192]{0}', space=vmem, size = 0x2000, scoped, tag = 'output window, operand 0']
    %11 = vsyncpa [#allocation4], 0
    %s12 = scalar_lea.sflag [#allocation4], 1
    %13 = vsyncpa %s12, 0
    %14 = vsyncpa [#allocation5], 0
    %s15 = scalar_lea.sflag [#allocation5], 1
    %16 = vsyncpa %s15, 0
    loop: start=0, step=1, limit=10
    $region2: #{tpu_custom_call.1} parent=1 // loop_pre_header
      _
    $region3: #{tpu_custom_call.1} parent=1 // loop_header
      %s18 = sphi 0, %s22
      %p19 = scmp.ge.s32.totalorder %s18, 10
      %s25 = sphi 0, %s37
      %s26 = sphi 0, %s33
      %s27 = sphi 0, %s25
      %s28 = sphi 0, %s26
      %s29 = sphi 0, %s27
      %s30 = sphi 0, %s28
      %s42 = sphi 0, %s44
      %s45 = sphi 0, %s42
      %s46 = sphi 0, %s45
      %s62 = sphi 0, %s46
      %s68 = sphi 0, %s70
      %s71 = sphi 0, %s68
      %s72 = sphi 0, %s71
      %s88 = sphi 0, %s72
      %s94 = sphi 0, %s96
      %s97 = sphi 0, %s94
      %s98 = sphi 0, %s97
      %s114 = sphi 0, %s98
      %s120 = sphi 0, %s122
      %s123 = sphi 0, %s120
      %s124 = sphi 0, %s123
      %s140 = sphi 0, %s124
      %s144 = sphi 0, %s144
      %s146 = sphi 0, %s144
      %s147 = sphi 0, %s146
      %s161 = sphi 0, %s147
      %s169 = sphi 0, %s171
      %s172 = sphi 0, %s169
      %s173 = sphi 0, %s172
      %s189 = sphi 0, %s173
    $region4: #{tpu_custom_call.1} parent=1 // loop_header_branch
      %21 = sbr.rel (%p19) target = $region8
    $region5: #{tpu_custom_call.1} parent=1 // loop_body
      %s23 = ssub.s32 %s18, 1
      %s24 = ssub.s32 %s18, 2
      %s31 = sadd.s32 1, %s26
      %p32 = scmp.ge.s32.totalorder %s31, 4
      %s33 = scalar_select %p32, 0, %s31
      %s34 = sadd.s32 1, %s25
      %s35 = scalar_select %p32, %s34, %s25
      %p36 = scmp.ge.s32.totalorder %s35, 2
      %s37 = scalar_select %p36, 0, %s35
      %s38 = ssub.s32 %s25, %s37
      %s39 = ssub.s32 %s26, %s33
      %s40 = sor.u32 %s38, %s39
      %p41 = scmp.eq.s32.totalorder %s40, 0
      %s43 = sadd.s32 %s42, 1
      %s44 = scalar_select %p41, %s42, %s43
      %p47 = pneg %p41
      %p48 = scmp.eq.s32.totalorder %s18, 7
      %p49 = por %p47, %p48
      %p50 = scmp.ne.s32.totalorder %s42, %s45
      %p51 = scmp.eq.s32.totalorder %s18, 0
      %p52 = por %p50, %p51
      %p53 = scmp.ne.s32.totalorder %s42, %s45
      %p54 = scmp.eq.s32.totalorder %s23, 7
      %p55 = por %p53, %p54
      %p56 = scmp.ne.s32.totalorder %s45, %s46
      %p57 = scmp.eq.s32.totalorder %s23, 0
      %p58 = por %p56, %p57
      %p59 = scmp.ne.s32.totalorder %s45, %s46
      %p60 = scmp.eq.s32.totalorder %s24, 7
      %p61 = por %p59, %p60
      %p63 = scmp.ne.s32.totalorder %s46, %s62
      %p64 = scmp.eq.s32.totalorder %s24, 0
      %p65 = por %p63, %p64
      %s66 = ssub.s32 %s25, %s37
      %p67 = scmp.eq.s32.totalorder %s66, 0
      %s69 = sadd.s32 %s68, 1
      %s70 = scalar_select %p67, %s68, %s69
      %p73 = pneg %p67
      %p74 = scmp.eq.s32.totalorder %s18, 7
      %p75 = por %p73, %p74
      %p76 = scmp.ne.s32.totalorder %s68, %s71
      %p77 = scmp.eq.s32.totalorder %s18, 0
      %p78 = por %p76, %p77
      %p79 = scmp.ne.s32.totalorder %s68, %s71
      %p80 = scmp.eq.s32.totalorder %s23, 7
      %p81 = por %p79, %p80
      %p82 = scmp.ne.s32.totalorder %s71, %s72
      %p83 = scmp.eq.s32.totalorder %s23, 0
      %p84 = por %p82, %p83
      %p85 = scmp.ne.s32.totalorder %s71, %s72
      %p86 = scmp.eq.s32.totalorder %s24, 7
      %p87 = por %p85, %p86
      %p89 = scmp.ne.s32.totalorder %s72, %s88
      %p90 = scmp.eq.s32.totalorder %s24, 0
      %p91 = por %p89, %p90
      %s92 = ssub.s32 %s25, %s37
      %p93 = scmp.eq.s32.totalorder %s92, 0
      %s95 = sadd.s32 %s94, 1
      %s96 = scalar_select %p93, %s94, %s95
      %p99 = pneg %p93
      %p100 = scmp.eq.s32.totalorder %s18, 7
      %p101 = por %p99, %p100
      %p102 = scmp.ne.s32.totalorder %s94, %s97
      %p103 = scmp.eq.s32.totalorder %s18, 0
      %p104 = por %p102, %p103
      %p105 = scmp.ne.s32.totalorder %s94, %s97
      %p106 = scmp.eq.s32.totalorder %s23, 7
      %p107 = por %p105, %p106
      %p108 = scmp.ne.s32.totalorder %s97, %s98
      %p109 = scmp.eq.s32.totalorder %s23, 0
      %p110 = por %p108, %p109
      %p111 = scmp.ne.s32.totalorder %s97, %s98
      %p112 = scmp.eq.s32.totalorder %s24, 7
      %p113 = por %p111, %p112
      %p115 = scmp.ne.s32.totalorder %s98, %s114
      %p116 = scmp.eq.s32.totalorder %s24, 0
      %p117 = por %p115, %p116
      %s118 = ssub.s32 %s25, %s37
      %p119 = scmp.eq.s32.totalorder %s118, 0
      %s121 = sadd.s32 %s120, 1
      %s122 = scalar_select %p119, %s120, %s121
      %p125 = pneg %p119
      %p126 = scmp.eq.s32.totalorder %s18, 7
      %p127 = por %p125, %p126
      %p128 = scmp.ne.s32.totalorder %s120, %s123
      %p129 = scmp.eq.s32.totalorder %s18, 0
      %p130 = por %p128, %p129
      %p131 = scmp.ne.s32.totalorder %s120, %s123
      %p132 = scmp.eq.s32.totalorder %s23, 7
      %p133 = por %p131, %p132
      %p134 = scmp.ne.s32.totalorder %s123, %s124
      %p135 = scmp.eq.s32.totalorder %s23, 0
      %p136 = por %p134, %p135
      %p137 = scmp.ne.s32.totalorder %s123, %s124
      %p138 = scmp.eq.s32.totalorder %s24, 7
      %p139 = por %p137, %p138
      %p141 = scmp.ne.s32.totalorder %s124, %s140
      %p142 = scmp.eq.s32.totalorder %s24, 0
      %p143 = por %p141, %p142
      %s145 = sadd.s32 %s144, 1
      %p148 = scmp.eq.s32.totalorder %s18, 7
      %p149 = scmp.ne.s32.totalorder %s144, %s146
      %p150 = scmp.eq.s32.totalorder %s18, 0
      %p151 = por %p149, %p150
      %p152 = scmp.ne.s32.totalorder %s144, %s146
      %p153 = scmp.eq.s32.totalorder %s23, 7
      %p154 = por %p152, %p153
      %p155 = scmp.ne.s32.totalorder %s146, %s147
      %p156 = scmp.eq.s32.totalorder %s23, 0
      %p157 = por %p155, %p156
      %p158 = scmp.ne.s32.totalorder %s146, %s147
      %p159 = scmp.eq.s32.totalorder %s24, 7
      %p160 = por %p158, %p159
      %p162 = scmp.ne.s32.totalorder %s147, %s161
      %p163 = scmp.eq.s32.totalorder %s24, 0
      %p164 = por %p162, %p163
      %s165 = ssub.s32 %s25, %s37
      %s166 = ssub.s32 %s26, %s33
      %s167 = sor.u32 %s165, %s166
      %p168 = scmp.eq.s32.totalorder %s167, 0
      %s170 = sadd.s32 %s169, 1
      %s171 = scalar_select %p168, %s169, %s170
      %p174 = pneg %p168
      %p175 = scmp.eq.s32.totalorder %s18, 7
      %p176 = por %p174, %p175
      %p177 = scmp.ne.s32.totalorder %s169, %s172
      %p178 = scmp.eq.s32.totalorder %s18, 0
      %p179 = por %p177, %p178
      %p180 = scmp.ne.s32.totalorder %s169, %s172
      %p181 = scmp.eq.s32.totalorder %s23, 7
      %p182 = por %p180, %p181
      %p183 = scmp.ne.s32.totalorder %s172, %s173
      %p184 = scmp.eq.s32.totalorder %s23, 0
      %p185 = por %p183, %p184
      %p186 = scmp.ne.s32.totalorder %s172, %s173
      %p187 = scmp.eq.s32.totalorder %s24, 7
      %p188 = por %p186, %p187
      %p190 = scmp.ne.s32.totalorder %s173, %s189
      %p191 = scmp.eq.s32.totalorder %s24, 0
      %p192 = por %p190, %p191
      %p193 = scmp.le.s32.totalorder 1, %s18
      %p194 = scmp.lt.s32.totalorder %s18, 9
      %p195 = pnand %p193, %p194
      %p196 = pneg %p195
      // Predicated region
      $region9: #{tpu_custom_call.1} parent=5 // pred_check
        _
      $region10: #{tpu_custom_call.1} parent=5 // pred_check_branch
        %198 = sbr.rel (%p195) target = $region12
      $region11: #{tpu_custom_call.1} parent=5 // pred_region
        %s199 = ssub.s32 %s18, 1
        // Predicated region
        $region13: #{tpu_custom_call.1} parent=11 // pred_check
          %p200 = pneg %p157
        $region14: #{tpu_custom_call.1} parent=11 // pred_check_branch
          %202 = sbr.rel (%p200) target = $region16
        $region15: #{tpu_custom_call.1} parent=11 // pred_region
          _
        $region16: #{tpu_custom_call.1} parent=11 // pred_fallthru
          _
      $region12: #{tpu_custom_call.1} parent=5 // pred_fallthru
        _
      %p203 = scmp.lt.s32.totalorder %s18, 8
      // Predicated region
      $region17: #{tpu_custom_call.1} parent=5 // pred_check
        %p204 = pneg %p203
      $region18: #{tpu_custom_call.1} parent=5 // pred_check_branch
        %206 = sbr.rel (%p204) target = $region20
      $region19: #{tpu_custom_call.1} parent=5 // pred_region
        // Predicated region
        $region21: #{tpu_custom_call.1} parent=19 // pred_check
          %p207 = pneg %p52
        $region22: #{tpu_custom_call.1} parent=19 // pred_check_branch
          %209 = sbr.rel (%p207) target = $region24
        $region23: #{tpu_custom_call.1} parent=19 // pred_region
          %s210 = sand.u32 %s42, 1
          %s211 = scalar_lea.sflag [#allocation4], %s210
          %s212 = sand.u32 %s42, 1
          %s213 = smul.addr %s212, 8
          %s214 = scalar_lea.vmem [#allocation3], %s213
          %216 = vsyncadd %s211, 0
          %s217 = smul.addr %s25, 4
          %s218 = sadd.s32 %s26, %s217
          %s219 = smul.addr %s218, 8
          %s220 = scalar_lea.hbm %s0, %s219
          %s222 = sshll.u32 %s220, 4
          %s223 = int_to_ptr.hbm [resolvable:$true] %s222
          %s224 = sshll.u32 %s214, 4
          %s225 = int_to_ptr.vmem [resolvable:$true] %s224
          %227 = dma.hbm_to_vmem [thread:$0]  %s223, 128, %s225, %s211
        $region24: #{tpu_custom_call.1} parent=19 // pred_fallthru
          _
        // Predicated region
        $region25: #{tpu_custom_call.1} parent=19 // pred_check
          %p228 = pneg %p78
        $region26: #{tpu_custom_call.1} parent=19 // pred_check_branch
          %230 = sbr.rel (%p228) target = $region28
        $region27: #{tpu_custom_call.1} parent=19 // pred_region
          %p231 = scmp.lt.s32.totalorder %s25, 1
          %s232 = scalar_select %p231, %s25, 1
          %s233 = smul.addr %s232, 8
          %s234 = scalar_lea.vmem %s1, %s233
        $region28: #{tpu_custom_call.1} parent=19 // pred_fallthru
          _
        // Predicated region
        $region29: #{tpu_custom_call.1} parent=19 // pred_check
          %p235 = pneg %p104
        $region30: #{tpu_custom_call.1} parent=19 // pred_check_branch
          %237 = sbr.rel (%p235) target = $region32
        $region31: #{tpu_custom_call.1} parent=19 // pred_region
          %p238 = scmp.lt.s32.totalorder %s25, 1
          %s239 = scalar_select %p238, %s25, 1
          %s240 = smul.addr %s239, 8
          %s241 = scalar_lea.vmem %s2, %s240
        $region32: #{tpu_custom_call.1} parent=19 // pred_fallthru
          _
        // Predicated region
        $region33: #{tpu_custom_call.1} parent=19 // pred_check
          %p242 = pneg %p130
        $region34: #{tpu_custom_call.1} parent=19 // pred_check_branch
          %244 = sbr.rel (%p242) target = $region36
        $region35: #{tpu_custom_call.1} parent=19 // pred_region
          %p245 = scmp.lt.s32.totalorder %s25, 1
          %s246 = scalar_select %p245, %s25, 1
          %s247 = smul.addr %s246, 8
          %s248 = scalar_lea.vmem %s3, %s247
        $region36: #{tpu_custom_call.1} parent=19 // pred_fallthru
          _
      $region20: #{tpu_custom_call.1} parent=5 // pred_fallthru
        _
      %p249 = scmp.le.s32.totalorder 1, %s18
      %p250 = scmp.lt.s32.totalorder %s18, 9
      %p251 = pnand %p249, %p250
      %p252 = pneg %p251
      // Predicated region
      $region37: #{tpu_custom_call.1} parent=5 // pred_check
        _
      $region38: #{tpu_custom_call.1} parent=5 // pred_check_branch
        %254 = sbr.rel (%p251) target = $region40
      $region39: #{tpu_custom_call.1} parent=5 // pred_region
        %s255 = ssub.s32 %s18, 1
        %s256 = sand.u32 %s45, 1
        %s257 = scalar_lea.sflag [#allocation4], %s256
        %s258 = sand.u32 %s45, 1
        %s259 = smul.addr %s258, 8
        %s260 = scalar_lea.vmem [#allocation3], %s259
        // Predicated region
        $region41: #{tpu_custom_call.1} parent=39 // pred_check
          %p261 = pneg %p58
        $region42: #{tpu_custom_call.1} parent=39 // pred_check_branch
          %263 = sbr.rel (%p261) target = $region44
        $region43: #{tpu_custom_call.1} parent=39 // pred_region
          %265 = dma.done %s257, 128
        $region44: #{tpu_custom_call.1} parent=39 // pred_fallthru
          _
        %s266 = sand.u32 %s45, 1
        %s267 = scalar_lea.sflag [#allocation4], %s266
        %s268 = sand.u32 %s45, 1
        %s269 = smul.addr %s268, 8
        %s270 = scalar_lea.vmem [#allocation3], %s269
        %p271 = pneg %p58
        %p272 = pneg %p55
        %p273 = scmp.lt.s32.totalorder %s27, 1
        %s274 = scalar_select %p273, %s27, 1
        %s275 = smul.addr %s274, 8
        %s276 = scalar_lea.vmem %s1, %s275
        %p277 = pneg %p84
        %p278 = pneg %p81
        %p279 = scmp.lt.s32.totalorder %s27, 1
        %s280 = scalar_select %p279, %s27, 1
        %s281 = smul.addr %s280, 8
        %s282 = scalar_lea.vmem %s2, %s281
        %p283 = pneg %p110
        %p284 = pneg %p107
        %p285 = scmp.lt.s32.totalorder %s27, 1
        %s286 = scalar_select %p285, %s27, 1
        %s287 = smul.addr %s286, 8
        %s288 = scalar_lea.vmem %s3, %s287
        %p289 = pneg %p136
        %p290 = pneg %p133
        %p291 = pneg %p157
        %p292 = pneg %p154
        %p293 = pneg %p185
        %p294 = pneg %p182
        %s295 = sand.u32 %s172, 1
        %s296 = scalar_lea.sflag [#allocation5], %s295
        %s297 = sand.u32 %s172, 1
        %s298 = smul.addr %s297, 8
        %s299 = scalar_lea.vmem [#allocation6], %s298
        %p300 = scmp.lt.s32.totalorder %s27, 1
        %s301 = scalar_select %p300, %s27, 1
        %s302 = smul.addr %s301, 8
        %s303 = scalar_lea.vmem %s1, %s302
        %p304 = scmp.lt.s32.totalorder %s27, 1
        %s305 = scalar_select %p304, %s27, 1
        %s306 = smul.addr %s305, 8
        %s307 = scalar_lea.vmem %s2, %s306
        %p308 = scmp.lt.s32.totalorder %s27, 1
        %s309 = scalar_select %p308, %s27, 1
        %s310 = smul.addr %s309, 8
        %s311 = scalar_lea.vmem %s3, %s310
        %v312 = vld [vmem:[%s260] sm:$0xff]
        %v313 = vmax.f32 %v312, -1.0
        %v314 = vmin.f32 %v313, 1.0
        %v315 = vld [vmem:[%s303] sm:$0xff]
        %v316 = vld [vmem:[%s307] sm:$0xff]
        %v317 = vld [vmem:[%s311] sm:$0xff]
        %s318 = sld [smem:[#allocation2]]
        %320 = vset.pattern.permute.xlu0 0
        %321 = vperm.xlu0 %320, %v316
        %v322 = vpop.permute.xlu0 %321
        %vm324 = vcmp.gt.f32.partialorder %v314, %v322
        %v325 = vstv %s318
        %v326 = vadd.f32 %v325, %v314
        %v327 = vmul.f32 %v314, %v326
        %v328 = vsel %vm324, %v327, %v314
        %v329 = vlaneseq
        %v330 = vand.u32 %v329, 127
        %s331 = smul.u32 %s28, 128
        %v332 = vstv %s331
        %v333 = vadd.s32 %v330, %v332
        %334 = vset.pattern.permute.xlu0 0
        %335 = vperm.xlu0 %334, %v315
        %v336 = vpop.permute.xlu0 %335
        %vm337 = vcmp.eq.s32.totalorder %v333, %v336
        %vm338 = vcmp.ne.s32.totalorder %v315, 4294967295
        %v339 = vsel %vm338, 1, 0
        %340 = vset.pattern.permute.xlu0 0
        %341 = vperm.xlu0 %340, %v339
        %v342 = vpop.permute.xlu0 %341
        %vm343 = vcmp.eq.s32.totalorder %v342, 1
        %vm344 = vmand %vm337, %vm343
        %346 = vset.pattern.permute.xlu0 0
        %347 = vperm.xlu0 %346, %v317
        %v348 = vpop.permute.xlu0 %347
        %v350 = vsel %vm344, %v348, %v328
        %v351 = vmul.f32 %v350, 64.0
        %352 = vst [vmem:[%s299] sm:$0xff] %v351
        %s353 = sand.u32 %s172, 1
        %s354 = scalar_lea.sflag [#allocation5], %s353
        %s355 = sand.u32 %s172, 1
        %s356 = smul.addr %s355, 8
        %s357 = scalar_lea.vmem [#allocation6], %s356
        // Predicated region
        $region45: #{tpu_custom_call.1} parent=39 // pred_check
          %p358 = pneg %p182
        $region46: #{tpu_custom_call.1} parent=39 // pred_check_branch
          %360 = sbr.rel (%p358) target = $region48
        $region47: #{tpu_custom_call.1} parent=39 // pred_region
          %362 = vsyncadd %s354, 0
          %s363 = smul.addr %s27, 4
          %s364 = sadd.s32 %s28, %s363
          %s365 = smul.addr %s364, 8
          %s366 = scalar_lea.hbm %s5, %s365
          %s368 = sshll.u32 %s357, 4
          %s369 = int_to_ptr.vmem [resolvable:$true] %s368
          %s370 = sshll.u32 %s366, 4
          %s371 = int_to_ptr.hbm [resolvable:$true] %s370
          %373 = dma.vmem_to_hbm [thread:$0]  %s369, 128, %s371, %s354
        $region48: #{tpu_custom_call.1} parent=39 // pred_fallthru
          _
      $region40: #{tpu_custom_call.1} parent=5 // pred_fallthru
        _
      %p374 = scmp.le.s32.totalorder 2, %s18
      // Predicated region
      $region49: #{tpu_custom_call.1} parent=5 // pred_check
        %p375 = pneg %p374
      $region50: #{tpu_custom_call.1} parent=5 // pred_check_branch
        %377 = sbr.rel (%p375) target = $region52
      $region51: #{tpu_custom_call.1} parent=5 // pred_region
        %s378 = ssub.s32 %s18, 2
        // Predicated region
        $region53: #{tpu_custom_call.1} parent=51 // pred_check
          %p379 = pneg %p188
        $region54: #{tpu_custom_call.1} parent=51 // pred_check_branch
          %381 = sbr.rel (%p379) target = $region56
        $region55: #{tpu_custom_call.1} parent=51 // pred_region
          %s382 = sand.u32 %s173, 1
          %s383 = scalar_lea.sflag [#allocation5], %s382
          %s384 = sand.u32 %s173, 1
          %s385 = smul.addr %s384, 8
          %s386 = scalar_lea.vmem [#allocation6], %s385
          %388 = dma.done %s383, 128
        $region56: #{tpu_custom_call.1} parent=51 // pred_fallthru
          _
      $region52: #{tpu_custom_call.1} parent=5 // pred_fallthru
        _
    $region6: #{tpu_custom_call.1} parent=1 // loop_footer
      %s22 = sadd.s32 1, %s18
    $region7: #{tpu_custom_call.1} parent=1 // loop_footer_branch
      %17 = sbr.rel target = $region3
    $region8: #{tpu_custom_call.1} parent=1 // loop_exit
      _
    %389 = vsyncpa [#allocation4], 1
    %s390 = scalar_lea.sflag [#allocation4], 1
    %391 = vsyncpa %s390, 1
    %392 = vsyncpa [#allocation5], 1
    %s393 = scalar_lea.sflag [#allocation5], 1
    %394 = vsyncpa %s393, 1

</llo_original>
